<compile_context>
chip_gen: v6e
topology: v6e:2x2x1
jax: 0.10.0
libtpu: 0.0.40
codegen_flags: <defaults>
</compile_context>

<pallas_src>
import jax
import jax.numpy as jnp
from jax.experimental import pallas as pl
from jax.experimental.pallas import tpu as pltpu


def invariant_dense_kernel(x_ref, w1_ref, b1_ref, w2_ref, b2_ref, o_ref):
    x = x_ref[...]
    # Layer 1 (lane-packed): Linear + swish (SiLU); f32 accumulation on the MXU.
    h = jnp.dot(x, w1_ref[...], preferred_element_type=jnp.float32) + b1_ref[...]
    h = h * jax.nn.sigmoid(h)
    # Layer 2 (lane-packed): Linear + leaky_relu (torch default slope 0.01).
    y = jnp.dot(h.astype(w2_ref.dtype), w2_ref[...],
                preferred_element_type=jnp.float32) + b2_ref[...]
    y = jnp.where(y >= 0.0, y, 0.01 * y)
    o_ref[...] = y.astype(o_ref.dtype)


def _round_up(x, m):
    return ((x + m - 1) // m) * m


def _is_dual_tensorcore():
    # v7x exposes 2 TensorCores per chip; v5e/v6e are single-TC.
    try:
        kind = jax.devices()[0].device_kind.lower()
    except Exception:
        return False
    return "v7" in kind


def prepare_invariant_dense_params(w1, b1, w2, b2):
    """One-time (param-load-time) weight prep, hoisted out of the forward path.

    Builds lane-packed block-diagonal weights so PACK = 128//dim logical rows
    share one vreg row.  Returns (pack, w1bd, b1p, w2bd, b2p) with shapes
    (pack*dim, pack*dim), (1, pack*dim), (pack*dim, pack*3*dim), (1, pack*3*dim).
    """
    dim = w1.shape[1]
    pack = 128 // dim if (128 % dim == 0) else 1
    eye = jnp.eye(pack, dtype=w1.dtype)
    w1bd = jnp.kron(eye, w1.T)                 # block-diag of W1^T
    w2bd = jnp.kron(eye, w2.T)                 # block-diag of W2^T
    b1p = jnp.tile(b1, (pack,))[None, :]
    b2p = jnp.tile(b2, (pack,))[None, :]
    return pack, w1bd, b1p, w2bd, b2p


def invariant_dense(x2d, pack, w1bd, b1p, w2bd, b2p, *, tm=None):
    """x2d: [N, dim]. Packed weights from prepare_invariant_dense_params."""
    N, dim = x2d.shape
    in_w = w1bd.shape[0]            # pack * dim      (128 at dim=32)
    out_w = w2bd.shape[1]           # pack * 3 * dim  (384 at dim=32)
    out_dim = out_w // pack         # 3 * dim

    # Pack `pack` logical rows per vreg row (free, contiguous reshape).  If N is
    # not a multiple of `pack`, pad by at most pack-1 rows (rare, tiny tail).
    tail = (-N) % pack
    if tail:
        x2d = jnp.pad(x2d, ((0, tail), (0, 0)))
    n_packed = (N + tail) // pack
    xp = x2d.reshape(n_packed, in_w)

    # --- Row tiling (packed rows) --------------------------------------------
    # 1024 packed rows/step => 2*(1024*128 + 1024*384)*4B ~= 4 MiB of
    # double-buffered in+out tiles: fits under the default scoped-VMEM limit on
    # v5e (16 MiB) and v6e/v7x (32 MiB).
    TM_MAX = 1024
    if tm is None:
        if n_packed <= TM_MAX:
            if _is_dual_tensorcore() and n_packed >= 16:
                # exactly 2 "parallel" grid steps so both v7x TCs get work
                tm = _round_up(pl.cdiv(n_packed, 2), 8)
            else:
                # single full block: no per-step overhead on single-TC chips
                tm = n_packed
        else:
            tm = TM_MAX
    grid = pl.cdiv(n_packed, tm)    # partial last block handled by Pallas

    isz = jnp.dtype(x2d.dtype).itemsize
    flops = 2 * n_packed * in_w * (in_w + out_w)
    bytes_accessed = isz * (n_packed * (in_w + out_w)
                            + in_w * (in_w + out_w) + in_w + out_w)

    out = pl.pallas_call(
        invariant_dense_kernel,
        out_shape=jax.ShapeDtypeStruct((n_packed, out_w), x2d.dtype),
        grid_spec=pltpu.PrefetchScalarGridSpec(
            num_scalar_prefetch=0,
            grid=(grid,),
            in_specs=[
                pl.BlockSpec((tm, in_w), lambda i: (i, 0)),           # x rows (pipelined)
                pl.BlockSpec(memory_space=pltpu.MemorySpace.VMEM),    # W1 block-diag resident
                pl.BlockSpec(memory_space=pltpu.MemorySpace.VMEM),    # b1 resident
                pl.BlockSpec(memory_space=pltpu.MemorySpace.VMEM),    # W2 block-diag resident
                pl.BlockSpec(memory_space=pltpu.MemorySpace.VMEM),    # b2 resident
            ],
            out_specs=pl.BlockSpec((tm, out_w), lambda i: (i, 0)),
        ),
        compiler_params=pltpu.CompilerParams(
            dimension_semantics=("parallel",)),
        cost_estimate=pl.CostEstimate(
            flops=flops,
            bytes_accessed=bytes_accessed,
            transcendentals=n_packed * in_w),
    )(xp, w1bd, b1p, w2bd, b2p)

    # Unpack: (n_packed, pack*out_dim) -> (n_packed*pack, out_dim); free reshape.
    y = out.reshape(n_packed * pack, out_dim)
    if tail:
        y = y[:N]
    return y


def xavier_uniform(key, out_features, in_features, gain=1.0):
    # PyTorch xavier_uniform_ on Linear weight of shape (out, in)
    bound = gain * (6.0 / (in_features + out_features)) ** 0.5
    return jax.random.uniform(key, (out_features, in_features),
                              jnp.float32, -bound, bound)


if __name__ == "__main__":
    dim = 32
    batch, seq = 2, 8           # s_j: (batch, n_atoms, dim)
    dropout = 0.0               # TODO(synk): dropout (training mode) not implemented; identity at rate 0 / eval

    key = jax.random.PRNGKey(0)
    kx, kw1, kw2 = jax.random.split(key, 3)

    s_j = jax.random.normal(kx, (batch, seq, dim), jnp.float32)

    # Deterministic param init matching the module's __init__ shapes.
    W1 = xavier_uniform(kw1, dim, dim)          # (out=dim, in=dim)
    b1 = jnp.zeros((dim,), jnp.float32)
    W2 = xavier_uniform(kw2, 3 * dim, dim)      # (out=3*dim, in=dim)
    b2 = jnp.zeros((3 * dim,), jnp.float32)

    # One-time weight prep (transpose + block-diagonal lane packing), hoisted
    # out of the per-forward path.
    pack, w1bd, b1p, w2bd, b2p = prepare_invariant_dense_params(W1, b1, W2, b2)

    # Forward: flatten tokens, run the fused kernel, reshape back.
    x2d = s_j.reshape(batch * seq, dim)
    out2d = invariant_dense(x2d, pack, w1bd, b1p, w2bd, b2p)
    out = out2d.reshape(batch, seq, 3 * dim)
    out = jax.block_until_ready(out)

    # Pure-JAX reference check.
    h_ref = x2d @ W1.T + b1
    h_ref = h_ref * jax.nn.sigmoid(h_ref)
    y_ref = h_ref @ W2.T + b2
    y_ref = jnp.where(y_ref >= 0.0, y_ref, 0.01 * y_ref).reshape(batch, seq, 3 * dim)

    assert out.shape == (batch, seq, 3 * dim)
    assert jnp.allclose(out, y_ref, atol=1e-5, rtol=1e-5)
    print("KERNEL_OK")
</pallas_src>

<mosaic_0001>
module attributes {stable_mosaic.version = 11 : i64} {
  func.func @invariant_dense_kernel(%arg0: i32, %arg1: memref<4x128xf32, #tpu.memory_space<vmem>>, %arg2: memref<128x128xf32, #tpu.memory_space<vmem>>, %arg3: memref<1x128xf32, #tpu.memory_space<vmem>>, %arg4: memref<128x384xf32, #tpu.memory_space<vmem>>, %arg5: memref<1x384xf32, #tpu.memory_space<vmem>>, %arg6: memref<4x384xf32, #tpu.memory_space<vmem>>) attributes {dimension_semantics = [#tpu.dimension_semantics<parallel>], iteration_bounds = array<i64: 1>, scalar_prefetch = 0 : i64, scratch_operands = 0 : i64, tpu.core_type = #tpu.core_type<tc>, window_params = [{transform_indices = @transform_0, window_bounds = array<i64: 4, 128>}, {pipeline_mode = #tpu.pipeline_mode<synchronous>, transform_indices = @transform_1, window_bounds = array<i64: 128, 128>}, {pipeline_mode = #tpu.pipeline_mode<synchronous>, transform_indices = @transform_2, window_bounds = array<i64: 1, 128>}, {pipeline_mode = #tpu.pipeline_mode<synchronous>, transform_indices = @transform_3, window_bounds = array<i64: 128, 384>}, {pipeline_mode = #tpu.pipeline_mode<synchronous>, transform_indices = @transform_4, window_bounds = array<i64: 1, 384>}, {transform_indices = @transform_5, window_bounds = array<i64: 4, 384>}]} {
    %c0 = arith.constant 0 : index
    %c0_0 = arith.constant 0 : index
    %0 = vector.load %arg1[%c0, %c0_0] : memref<4x128xf32, #tpu.memory_space<vmem>>, vector<4x128xf32>
    %c0_1 = arith.constant 0 : index
    %c0_2 = arith.constant 0 : index
    %1 = vector.load %arg2[%c0_1, %c0_2] : memref<128x128xf32, #tpu.memory_space<vmem>>, vector<128x128xf32>
    %cst = arith.constant dense<0.000000e+00> : vector<4x128xf32>
    %2 = tpu.matmul %0, %1, %cst {dimension_numbers = #tpu.dot_dimension_numbers<[1], [0], [0], [1], [0, 0, 1, 1], [], []>} : vector<4x128xf32>, vector<128x128xf32>, vector<4x128xf32> -> vector<4x128xf32>
    %c0_3 = arith.constant 0 : index
    %c0_4 = arith.constant 0 : index
    %3 = vector.load %arg3[%c0_3, %c0_4] : memref<1x128xf32, #tpu.memory_space<vmem>>, vector<1x128xf32>
    %4 = vector.broadcast %3 : vector<1x128xf32> to vector<4x128xf32>
    %5 = arith.addf %2, %4 : vector<4x128xf32>
    %6 = arith.negf %5 : vector<4x128xf32>
    %7 = math.exp %6 : vector<4x128xf32>
    %cst_5 = arith.constant 1.000000e+00 : f32
    %8 = vector.broadcast %cst_5 : f32 to vector<4x128xf32>
    %9 = arith.addf %8, %7 : vector<4x128xf32>
    %10 = arith.divf %8, %9 : vector<4x128xf32>
    %11 = arith.mulf %5, %10 : vector<4x128xf32>
    %c0_6 = arith.constant 0 : index
    %c0_7 = arith.constant 0 : index
    %12 = vector.load %arg4[%c0_6, %c0_7] : memref<128x384xf32, #tpu.memory_space<vmem>>, vector<128x384xf32>
    %cst_8 = arith.constant dense<0.000000e+00> : vector<4x384xf32>
    %13 = tpu.matmul %11, %12, %cst_8 {dimension_numbers = #tpu.dot_dimension_numbers<[1], [0], [0], [1], [0, 0, 1, 1], [], []>} : vector<4x128xf32>, vector<128x384xf32>, vector<4x384xf32> -> vector<4x384xf32>
    %c0_9 = arith.constant 0 : index
    %c0_10 = arith.constant 0 : index
    %14 = vector.load %arg5[%c0_9, %c0_10] : memref<1x384xf32, #tpu.memory_space<vmem>>, vector<1x384xf32>
    %15 = vector.broadcast %14 : vector<1x384xf32> to vector<4x384xf32>
    %16 = arith.addf %13, %15 : vector<4x384xf32>
    %cst_11 = arith.constant 0.000000e+00 : f32
    %17 = vector.broadcast %cst_11 : f32 to vector<4x384xf32>
    %18 = arith.cmpf oge, %16, %17 : vector<4x384xf32>
    %cst_12 = arith.constant 0.00999999977 : f32
    %19 = vector.broadcast %cst_12 : f32 to vector<4x384xf32>
    %20 = arith.mulf %19, %16 : vector<4x384xf32>
    %21 = arith.select %18, %16, %20 : vector<4x384xi1>, vector<4x384xf32>
    %c0_13 = arith.constant 0 : index
    %c0_14 = arith.constant 0 : index
    %22 = vector.load %arg6[%c0_13, %c0_14] : memref<4x384xf32, #tpu.memory_space<vmem>>, vector<4x384xf32>
    tpu.vector_store %arg6[%c0_13, %c0_14], %21 {strides = array<i32>} : memref<4x384xf32, #tpu.memory_space<vmem>>, vector<4x384xf32>,
    return
  }
  func.func @transform_0(%arg0: i32) -> (i32, i32) {
    %c0_i32 = arith.constant 0 : i32
    %c0_i32_0 = arith.constant 0 : i32
    return %arg0, %c0_i32 : i32, i32
  }
  func.func @transform_1(%arg0: i32) -> (i32, i32) {
    %c0_i32 = arith.constant 0 : i32
    %c0_i32_0 = arith.constant 0 : i32
    %c0_i32_1 = arith.constant 0 : i32
    return %c0_i32, %c0_i32_0 : i32, i32
  }
  func.func @transform_2(%arg0: i32) -> (i32, i32) {
    %c0_i32 = arith.constant 0 : i32
    %c0_i32_0 = arith.constant 0 : i32
    %c0_i32_1 = arith.constant 0 : i32
    return %c0_i32, %c0_i32_0 : i32, i32
  }
  func.func @transform_3(%arg0: i32) -> (i32, i32) {
    %c0_i32 = arith.constant 0 : i32
    %c0_i32_0 = arith.constant 0 : i32
    %c0_i32_1 = arith.constant 0 : i32
    return %c0_i32, %c0_i32_0 : i32, i32
  }
  func.func @transform_4(%arg0: i32) -> (i32, i32) {
    %c0_i32 = arith.constant 0 : i32
    %c0_i32_0 = arith.constant 0 : i32
    %c0_i32_1 = arith.constant 0 : i32
    return %c0_i32, %c0_i32_0 : i32, i32
  }
  func.func @transform_5(%arg0: i32) -> (i32, i32) {
    %c0_i32 = arith.constant 0 : i32
    %c0_i32_0 = arith.constant 0 : i32
    return %arg0, %c0_i32 : i32, i32
  }
}

</mosaic_0001>

<llo_original>
// kernel: tpu_custom_call.1
$region0: #{tpu_custom_call.1}
  #allocation0 [shape = 'u32[]', space=smem, size = 0x4, offset = 0x4, fixed_abs, tag = 'smem constant byte address 0x4 - core index']
  #allocation1 [shape = 'u32[144,128]{1,0:T(1,128)}', space=vmem, size = 0x12000, scoped, tag = 'internal scratch']
  %s0 = inlined_call_operand.hbm [shape: f32[4,128], index: 0, kind: input, shape index: {}]
  %s1 = inlined_call_operand.hbm [shape: f32[128,128], index: 1, kind: input, shape index: {}]
  %s2 = inlined_call_operand.vmem [shape: f32[1,128], index: 2, kind: input, shape index: {}]
  %s3 = inlined_call_operand.hbm [shape: f32[128,384], index: 3, kind: input, shape index: {}]
  %s4 = inlined_call_operand.vmem [shape: f32[1,384], index: 4, kind: input, shape index: {}]
  %s5 = inlined_call_operand.hbm [shape: f32[4,384], index: 5, kind: output, shape index: {}]
  %s6 = sld [smem:[#allocation0]]
  $region42: #{tpu_custom_call.1} parent=0
    _
  %s8 = ssub.s32 1, %s6
  %s9 = scalar_select 0, %s8, %s6
  $region1: #{tpu_custom_call.1} parent=0
    #allocation2 [shape = 'u8[2048]{0}', space=vmem, size = 0x800, scoped, tag = 'input window, operand 0, single buffered']
    #allocation3 [shape = 's32[1]{0}', space=sflag, size = 0x4, scoped, tag = 'scoped memory for tpu_custom_call.1']
    #allocation4 [shape = 's32[1]{0}', space=sflag, size = 0x4, scoped, tag = 'scoped memory for tpu_custom_call.1']
    #allocation5 [shape = 'u8[65536]{0}', space=vmem, size = 0x10000, scoped, tag = 'input window, operand 1, single buffered']
    #allocation6 [shape = 's32[1]{0}', space=sflag, size = 0x4, scoped, tag = 'scoped memory for tpu_custom_call.1']
    #allocation7 [shape = 'u8[196608]{0}', space=vmem, size = 0x30000, scoped, tag = 'input window, operand 3, single buffered']
    #allocation8 [shape = 'u8[6144]{0}', space=vmem, size = 0x1800, scoped, tag = 'output window, operand 0, single buffered']
    %10 = vsyncpa [#allocation3], 0
    %11 = vsyncpa [#allocation6], 0
    %12 = vsyncpa [#allocation4], 0
    // Predicated region
    $region2: #{tpu_custom_call.1} parent=1 // pred_check
      _
    $region3: #{tpu_custom_call.1} parent=1 // pred_check_branch
      %14 = sbr.rel (0) target = $region5
    $region4: #{tpu_custom_call.1} parent=1 // pred_region
      %s16 = ssub.s32 64, 64
      %17 = vsyncadd [#allocation3], %s16
      %s19 = sshll.u32 [#allocation2], 4
      %s20 = int_to_ptr.vmem [resolvable:$true] %s19
      %22 = dma.hbm_to_vmem [thread:$0]  %s0, 64, %s20, [#allocation3]
    $region5: #{tpu_custom_call.1} parent=1 // pred_fallthru
      _
    // Predicated region
    $region6: #{tpu_custom_call.1} parent=1 // pred_check
      _
    $region7: #{tpu_custom_call.1} parent=1 // pred_check_branch
      %24 = sbr.rel (0) target = $region9
    $region8: #{tpu_custom_call.1} parent=1 // pred_region
      %s26 = ssub.s32 2048, 2048
      %27 = vsyncadd [#allocation6], %s26
      %s28 = sshll.u32 [#allocation5], 4
      %s29 = int_to_ptr.vmem [resolvable:$true] %s28
      %34 = dma.hbm_to_vmem [thread:$0]  %s1, 2048, %s29, [#allocation6], 128, 128, 8
    $region9: #{tpu_custom_call.1} parent=1 // pred_fallthru
      _
    // Predicated region
    $region10: #{tpu_custom_call.1} parent=1 // pred_check
      _
    $region11: #{tpu_custom_call.1} parent=1 // pred_check_branch
      %36 = sbr.rel (0) target = $region13
    $region12: #{tpu_custom_call.1} parent=1 // pred_region
      _
    $region13: #{tpu_custom_call.1} parent=1 // pred_fallthru
      _
    // Predicated region
    $region14: #{tpu_custom_call.1} parent=1 // pred_check
      _
    $region15: #{tpu_custom_call.1} parent=1 // pred_check_branch
      %38 = sbr.rel (0) target = $region17
    $region16: #{tpu_custom_call.1} parent=1 // pred_region
      %s40 = ssub.s32 6144, 6144
      %41 = vsyncadd [#allocation6], %s40
      %s42 = sshll.u32 [#allocation7], 4
      %s43 = int_to_ptr.vmem [resolvable:$true] %s42
      %48 = dma.hbm_to_vmem [thread:$0]  %s3, 6144, %s43, [#allocation6], 384, 384, 24
    $region17: #{tpu_custom_call.1} parent=1 // pred_fallthru
      _
    // Predicated region
    $region18: #{tpu_custom_call.1} parent=1 // pred_check
      _
    $region19: #{tpu_custom_call.1} parent=1 // pred_check_branch
      %50 = sbr.rel (0) target = $region21
    $region20: #{tpu_custom_call.1} parent=1 // pred_region
      _
    $region21: #{tpu_custom_call.1} parent=1 // pred_fallthru
      _
    // Predicated region
    $region22: #{tpu_custom_call.1} parent=1 // pred_check
      _
    $region23: #{tpu_custom_call.1} parent=1 // pred_check_branch
      %52 = sbr.rel (0) target = $region25
    $region24: #{tpu_custom_call.1} parent=1 // pred_region
      %53 = dma.done [#allocation3], 64
    $region25: #{tpu_custom_call.1} parent=1 // pred_fallthru
      _
    // Predicated region
    $region26: #{tpu_custom_call.1} parent=1 // pred_check
      _
    $region27: #{tpu_custom_call.1} parent=1 // pred_check_branch
      %55 = sbr.rel (0) target = $region29
    $region28: #{tpu_custom_call.1} parent=1 // pred_region
      %56 = dma.done [#allocation6], 2048
    $region29: #{tpu_custom_call.1} parent=1 // pred_fallthru
      _
    // Predicated region
    $region30: #{tpu_custom_call.1} parent=1 // pred_check
      _
    $region31: #{tpu_custom_call.1} parent=1 // pred_check_branch
      %58 = sbr.rel (0) target = $region33
    $region32: #{tpu_custom_call.1} parent=1 // pred_region
      %59 = dma.done [#allocation6], 6144
    $region33: #{tpu_custom_call.1} parent=1 // pred_fallthru
      _
    %v60 = vld [vmem:[#allocation2] sm:$0xf]
    %v61 = vld [vmem:[#allocation5] sm:$0xff]
    %v62 = vld [vmem:[#allocation5 + $0x8] sm:$0xff]
    %v63 = vld [vmem:[#allocation5 + $0x10] sm:$0xff]
    %v64 = vld [vmem:[#allocation5 + $0x18] sm:$0xff]
    %v65 = vld [vmem:[#allocation5 + $0x20] sm:$0xff]
    %v66 = vld [vmem:[#allocation5 + $0x28] sm:$0xff]
    %v67 = vld [vmem:[#allocation5 + $0x30] sm:$0xff]
    %v68 = vld [vmem:[#allocation5 + $0x38] sm:$0xff]
    %v69 = vld [vmem:[#allocation5 + $0x40] sm:$0xff]
    %v70 = vld [vmem:[#allocation5 + $0x48] sm:$0xff]
    %v71 = vld [vmem:[#allocation5 + $0x50] sm:$0xff]
    %v72 = vld [vmem:[#allocation5 + $0x58] sm:$0xff]
    %v73 = vld [vmem:[#allocation5 + $0x60] sm:$0xff]
    %v74 = vld [vmem:[#allocation5 + $0x68] sm:$0xff]
    %v75 = vld [vmem:[#allocation5 + $0x70] sm:$0xff]
    %v76 = vld [vmem:[#allocation5 + $0x78] sm:$0xff]
    %v77 = vld [vmem:[%s2] sm:$0x1]
    %v79 = vlaneseq
    %v80 = vshrl.u32 %v79, 7
    %v81 = vsub.s32 0, %v80
    %v82 = vrot.slane %v77, %v81
    %84 = vmatprep.subr.mxu0 0.0
    %85 = vmatpush1.msra.mxu0 %v76
    %86 = vmatprep.subr.mxu0 0.0
    %87 = vmatpush1.msra.mxu0 %v75
    %88 = vmatprep.subr.mxu0 0.0
    %89 = vmatpush1.msra.mxu0 %v74
    %90 = vmatprep.subr.mxu0 0.0
    %91 = vmatpush1.msra.mxu0 %v73
    %92 = vmatprep.subr.mxu0 0.0
    %93 = vmatpush1.msra.mxu0 %v72
    %94 = vmatprep.subr.mxu0 0.0
    %95 = vmatpush1.msra.mxu0 %v71
    %96 = vmatprep.subr.mxu0 0.0
    %97 = vmatpush1.msra.mxu0 %v70
    %98 = vmatprep.subr.mxu0 0.0
    %99 = vmatpush1.msra.mxu0 %v69
    %100 = vmatprep.subr.mxu0 0.0
    %101 = vmatpush1.msra.mxu0 %v68
    %102 = vmatprep.subr.mxu0 0.0
    %103 = vmatpush1.msra.mxu0 %v67
    %104 = vmatprep.subr.mxu0 0.0
    %105 = vmatpush1.msra.mxu0 %v66
    %106 = vmatprep.subr.mxu0 0.0
    %107 = vmatpush1.msra.mxu0 %v65
    %108 = vmatprep.subr.mxu0 0.0
    %109 = vmatpush1.msra.mxu0 %v64
    %110 = vmatprep.subr.mxu0 0.0
    %111 = vmatpush1.msra.mxu0 %v63
    %112 = vmatprep.subr.mxu0 0.0
    %113 = vmatpush1.msra.mxu0 %v62
    %114 = vmatprep.subr.mxu0 0.0
    %115 = vmatpush1.msra.mxu0 %v61
    %116 = vmatprep.subr.mxu0 0.0
    %117 = vmatpush2.msra.mxu0 0.0
    %118 = vmatprep.subr.mxu0 0.0
    %119 = vmatpush2.msra.mxu0 0.0
    %120 = vmatprep.subr.mxu0 0.0
    %121 = vmatpush2.msra.mxu0 0.0
    %122 = vmatprep.subr.mxu0 0.0
    %123 = vmatpush2.msra.mxu0 0.0
    %124 = vmatprep.subr.mxu0 0.0
    %125 = vmatpush2.msra.mxu0 0.0
    %126 = vmatprep.subr.mxu0 0.0
    %127 = vmatpush2.msra.mxu0 0.0
    %128 = vmatprep.subr.mxu0 0.0
    %129 = vmatpush2.msra.mxu0 0.0
    %130 = vmatprep.subr.mxu0 0.0
    %131 = vmatpush2.msra.mxu0 0.0
    %132 = vmatprep.subr.mxu0 0.0
    %133 = vmatpush2.msra.mxu0 0.0
    %134 = vmatprep.subr.mxu0 0.0
    %135 = vmatpush2.msra.mxu0 0.0
    %136 = vmatprep.subr.mxu0 0.0
    %137 = vmatpush2.msra.mxu0 0.0
    %138 = vmatprep.subr.mxu0 0.0
    %139 = vmatpush2.msra.mxu0 0.0
    %140 = vmatprep.subr.mxu0 0.0
    %141 = vmatpush2.msra.mxu0 0.0
    %142 = vmatprep.subr.mxu0 0.0
    %143 = vmatpush2.msra.mxu0 0.0
    %144 = vmatprep.subr.mxu0 0.0
    %145 = vmatpush2.msra.mxu0 0.0
    %146 = vmatprep.subr.mxu0 0.0
    %147 = vmatpush2.msra.mxu0 0.0
    %148 = vmatprep.mubr.f32.mxu0 0.0
    %149 = vmatmul.mubr.f32.gmra.mxu0 %v60
    %v150 = vpop.f32.mrf.mxu0
    %v151 = vadd.f32 %v82, %v150
    %v152 = vpop.f32.mrf.mxu0
    %153 = vdwg.mxu0
    %v154 = vxor.u32 %v151, 2147483648
    %v155 = vmul.f32 %v154, 1.442695
    %v156 = vpow.pop %v155
    %v157 = vadd.f32 %v156, 1.0
    %v158 = vrcp.pop %v157
    %v159 = vmul.f32 1.0, %v158
    %v160 = vmul.f32 %v151, %v159
    %v161 = vld [vmem:[#allocation7] sm:$0xff]
    %v162 = vld [vmem:[#allocation7 + $0x8] sm:$0xff]
    %v163 = vld [vmem:[#allocation7 + $0x10] sm:$0xff]
    %v164 = vld [vmem:[#allocation7 + $0x18] sm:$0xff]
    %v165 = vld [vmem:[#allocation7 + $0x20] sm:$0xff]
    %v166 = vld [vmem:[#allocation7 + $0x28] sm:$0xff]
    %v167 = vld [vmem:[#allocation7 + $0x30] sm:$0xff]
    %v168 = vld [vmem:[#allocation7 + $0x38] sm:$0xff]
    %v169 = vld [vmem:[#allocation7 + $0x40] sm:$0xff]
    %v170 = vld [vmem:[#allocation7 + $0x48] sm:$0xff]
    %v171 = vld [vmem:[#allocation7 + $0x50] sm:$0xff]
    %v172 = vld [vmem:[#allocation7 + $0x58] sm:$0xff]
    %v173 = vld [vmem:[#allocation7 + $0x60] sm:$0xff]
    %v174 = vld [vmem:[#allocation7 + $0x68] sm:$0xff]
    %v175 = vld [vmem:[#allocation7 + $0x70] sm:$0xff]
    %v176 = vld [vmem:[#allocation7 + $0x78] sm:$0xff]
    %v177 = vld [vmem:[#allocation7 + $0x80] sm:$0xff]
    %v178 = vld [vmem:[#allocation7 + $0x88] sm:$0xff]
    %v179 = vld [vmem:[#allocation7 + $0x90] sm:$0xff]
    %v180 = vld [vmem:[#allocation7 + $0x98] sm:$0xff]
    %v181 = vld [vmem:[#allocation7 + $0xa0] sm:$0xff]
    %v182 = vld [vmem:[#allocation7 + $0xa8] sm:$0xff]
    %v183 = vld [vmem:[#allocation7 + $0xb0] sm:$0xff]
    %v184 = vld [vmem:[#allocation7 + $0xb8] sm:$0xff]
    %v185 = vld [vmem:[#allocation7 + $0xc0] sm:$0xff]
    %v186 = vld [vmem:[#allocation7 + $0xc8] sm:$0xff]
    %v187 = vld [vmem:[#allocation7 + $0xd0] sm:$0xff]
    %v188 = vld [vmem:[#allocation7 + $0xd8] sm:$0xff]
    %v189 = vld [vmem:[#allocation7 + $0xe0] sm:$0xff]
    %v190 = vld [vmem:[#allocation7 + $0xe8] sm:$0xff]
    %v191 = vld [vmem:[#allocation7 + $0xf0] sm:$0xff]
    %v192 = vld [vmem:[#allocation7 + $0xf8] sm:$0xff]
    %v193 = vld [vmem:[#allocation7 + $0x100] sm:$0xff]
    %v194 = vld [vmem:[#allocation7 + $0x108] sm:$0xff]
    %v195 = vld [vmem:[#allocation7 + $0x110] sm:$0xff]
    %v196 = vld [vmem:[#allocation7 + $0x118] sm:$0xff]
    %v197 = vld [vmem:[#allocation7 + $0x120] sm:$0xff]
    %v198 = vld [vmem:[#allocation7 + $0x128] sm:$0xff]
    %v199 = vld [vmem:[#allocation7 + $0x130] sm:$0xff]
    %v200 = vld [vmem:[#allocation7 + $0x138] sm:$0xff]
    %v201 = vld [vmem:[#allocation7 + $0x140] sm:$0xff]
    %v202 = vld [vmem:[#allocation7 + $0x148] sm:$0xff]
    %v203 = vld [vmem:[#allocation7 + $0x150] sm:$0xff]
    %v204 = vld [vmem:[#allocation7 + $0x158] sm:$0xff]
    %v205 = vld [vmem:[#allocation7 + $0x160] sm:$0xff]
    %v206 = vld [vmem:[#allocation7 + $0x168] sm:$0xff]
    %v207 = vld [vmem:[#allocation7 + $0x170] sm:$0xff]
    %v208 = vld [vmem:[#allocation7 + $0x178] sm:$0xff]
    %v209 = vld [vmem:[%s4] sm:$0x7]
    %v211 = vlaneseq
    %v212 = vshrl.u32 %v211, 7
    %v213 = vsub.s32 0, %v212
    %v214 = vrot.slane %v209, %v213
    %v215 = vlaneseq
    %v216 = vshrl.u32 %v215, 7
    %v217 = vsub.s32 1, %v216
    %v218 = vrot.slane %v209, %v217
    %v219 = vlaneseq
    %v220 = vshrl.u32 %v219, 7
    %v221 = vsub.s32 2, %v220
    %v222 = vrot.slane %v209, %v221
    %226 = vmatprep.subr.mxu0 %v207
    %227 = vmatpush1.msra.mxu0 %v206
    %228 = vmatprep.subr.mxu0 %v204
    %229 = vmatpush1.msra.mxu0 %v203
    %230 = vmatprep.subr.mxu0 %v201
    %231 = vmatpush1.msra.mxu0 %v200
    %232 = vmatprep.subr.mxu0 %v198
    %233 = vmatpush1.msra.mxu0 %v197
    %234 = vmatprep.subr.mxu0 %v195
    %235 = vmatpush1.msra.mxu0 %v194
    %236 = vmatprep.subr.mxu0 %v192
    %237 = vmatpush1.msra.mxu0 %v191
    %238 = vmatprep.subr.mxu0 %v189
    %239 = vmatpush1.msra.mxu0 %v188
    %240 = vmatprep.subr.mxu0 %v186
    %241 = vmatpush1.msra.mxu0 %v185
    %242 = vmatprep.subr.mxu0 %v183
    %243 = vmatpush1.msra.mxu0 %v182
    %244 = vmatprep.subr.mxu0 %v180
    %245 = vmatpush1.msra.mxu0 %v179
    %246 = vmatprep.subr.mxu0 %v177
    %247 = vmatpush1.msra.mxu0 %v176
    %248 = vmatprep.subr.mxu0 %v174
    %249 = vmatpush1.msra.mxu0 %v173
    %250 = vmatprep.subr.mxu0 %v171
    %251 = vmatpush1.msra.mxu0 %v170
    %252 = vmatprep.subr.mxu0 %v168
    %253 = vmatpush1.msra.mxu0 %v167
    %254 = vmatprep.subr.mxu0 %v165
    %255 = vmatpush1.msra.mxu0 %v164
    %256 = vmatprep.subr.mxu0 %v162
    %257 = vmatpush1.msra.mxu0 %v161
    %258 = vmatprep.subr.mxu0 0.0
    %259 = vmatpush2.msra.mxu0 0.0
    %260 = vmatprep.subr.mxu0 0.0
    %261 = vmatpush2.msra.mxu0 0.0
    %262 = vmatprep.subr.mxu0 0.0
    %263 = vmatpush2.msra.mxu0 0.0
    %264 = vmatprep.subr.mxu0 0.0
    %265 = vmatpush2.msra.mxu0 0.0
    %266 = vmatprep.subr.mxu0 0.0
    %267 = vmatpush2.msra.mxu0 0.0
    %268 = vmatprep.subr.mxu0 0.0
    %269 = vmatpush2.msra.mxu0 0.0
    %270 = vmatprep.subr.mxu0 0.0
    %271 = vmatpush2.msra.mxu0 0.0
    %272 = vmatprep.subr.mxu0 0.0
    %273 = vmatpush2.msra.mxu0 0.0
    %274 = vmatprep.subr.mxu0 0.0
    %275 = vmatpush2.msra.mxu0 0.0
    %276 = vmatprep.subr.mxu0 0.0
    %277 = vmatpush2.msra.mxu0 0.0
    %278 = vmatprep.subr.mxu0 0.0
    %279 = vmatpush2.msra.mxu0 0.0
    %280 = vmatprep.subr.mxu0 0.0
    %281 = vmatpush2.msra.mxu0 0.0
    %282 = vmatprep.subr.mxu0 0.0
    %283 = vmatpush2.msra.mxu0 0.0
    %284 = vmatprep.subr.mxu0 0.0
    %285 = vmatpush2.msra.mxu0 0.0
    %286 = vmatprep.subr.mxu0 0.0
    %287 = vmatpush2.msra.mxu0 0.0
    %288 = vmatprep.subr.mxu0 0.0
    %289 = vmatpush2.msra.mxu0 0.0
    %290 = vmatprep.mubr.f32.mxu0 0.0
    %291 = vmatmul.mubr.f32.gmra.mxu0 %v160
    %v292 = vpop.f32.mrf.mxu0
    %v293 = vadd.f32 %v214, %v292
    %v294 = vpop.f32.mrf.mxu0
    %v295 = vadd.f32 %v218, %v294
    %296 = vdwg.mxu0
    %297 = vmatprep.subr.mxu0 0.0
    %298 = vmatpush1.msra.mxu0 %v208
    %299 = vmatprep.subr.mxu0 0.0
    %300 = vmatpush1.msra.mxu0 %v205
    %301 = vmatprep.subr.mxu0 0.0
    %302 = vmatpush1.msra.mxu0 %v202
    %303 = vmatprep.subr.mxu0 0.0
    %304 = vmatpush1.msra.mxu0 %v199
    %305 = vmatprep.subr.mxu0 0.0
    %306 = vmatpush1.msra.mxu0 %v196
    %307 = vmatprep.subr.mxu0 0.0
    %308 = vmatpush1.msra.mxu0 %v193
    %309 = vmatprep.subr.mxu0 0.0
    %310 = vmatpush1.msra.mxu0 %v190
    %311 = vmatprep.subr.mxu0 0.0
    %312 = vmatpush1.msra.mxu0 %v187
    %313 = vmatprep.subr.mxu0 0.0
    %314 = vmatpush1.msra.mxu0 %v184
    %315 = vmatprep.subr.mxu0 0.0
    %316 = vmatpush1.msra.mxu0 %v181
    %317 = vmatprep.subr.mxu0 0.0
    %318 = vmatpush1.msra.mxu0 %v178
    %319 = vmatprep.subr.mxu0 0.0
    %320 = vmatpush1.msra.mxu0 %v175
    %321 = vmatprep.subr.mxu0 0.0
    %322 = vmatpush1.msra.mxu0 %v172
    %323 = vmatprep.subr.mxu0 0.0
    %324 = vmatpush1.msra.mxu0 %v169
    %325 = vmatprep.subr.mxu0 0.0
    %326 = vmatpush1.msra.mxu0 %v166
    %327 = vmatprep.subr.mxu0 0.0
    %328 = vmatpush1.msra.mxu0 %v163
    %329 = vmatprep.subr.mxu0 0.0
    %330 = vmatpush2.msra.mxu0 0.0
    %331 = vmatprep.subr.mxu0 0.0
    %332 = vmatpush2.msra.mxu0 0.0
    %333 = vmatprep.subr.mxu0 0.0
    %334 = vmatpush2.msra.mxu0 0.0
    %335 = vmatprep.subr.mxu0 0.0
    %336 = vmatpush2.msra.mxu0 0.0
    %337 = vmatprep.subr.mxu0 0.0
    %338 = vmatpush2.msra.mxu0 0.0
    %339 = vmatprep.subr.mxu0 0.0
    %340 = vmatpush2.msra.mxu0 0.0
    %341 = vmatprep.subr.mxu0 0.0
    %342 = vmatpush2.msra.mxu0 0.0
    %343 = vmatprep.subr.mxu0 0.0
    %344 = vmatpush2.msra.mxu0 0.0
    %345 = vmatprep.subr.mxu0 0.0
    %346 = vmatpush2.msra.mxu0 0.0
    %347 = vmatprep.subr.mxu0 0.0
    %348 = vmatpush2.msra.mxu0 0.0
    %349 = vmatprep.subr.mxu0 0.0
    %350 = vmatpush2.msra.mxu0 0.0
    %351 = vmatprep.subr.mxu0 0.0
    %352 = vmatpush2.msra.mxu0 0.0
    %353 = vmatprep.subr.mxu0 0.0
    %354 = vmatpush2.msra.mxu0 0.0
    %355 = vmatprep.subr.mxu0 0.0
    %356 = vmatpush2.msra.mxu0 0.0
    %357 = vmatprep.subr.mxu0 0.0
    %358 = vmatpush2.msra.mxu0 0.0
    %359 = vmatprep.subr.mxu0 0.0
    %360 = vmatpush2.msra.mxu0 0.0
    %361 = vmatprep.mubr.f32.mxu0 0.0
    %362 = vmatmul.mubr.f32.gmra.mxu0 %v160
    %v363 = vpop.f32.mrf.mxu0
    %v364 = vadd.f32 %v222, %v363
    %v365 = vpop.f32.mrf.mxu0
    %366 = vdwg.mxu0
    %vm367 = vcmp.ge.f32.partialorder %v293, 0.0
    %vm368 = vcmp.ge.f32.partialorder %v295, 0.0
    %vm369 = vcmp.ge.f32.partialorder %v364, 0.0
    %v370 = vmul.f32 %v293, 0.01
    %v371 = vmul.f32 %v295, 0.01
    %v372 = vmul.f32 %v364, 0.01
    %v373 = vsel %vm367, %v293, %v370
    %v374 = vsel %vm368, %v295, %v371
    %v375 = vsel %vm369, %v364, %v372
    %v378 = vcombine.low %v373, %v374
    %380 = vst [vmem:[#allocation8] sm:$0xff] %v378
    %381 = vst [vmem:[#allocation8 + $0x8] sm:$0xf] %v375
    // Predicated region
    $region34: #{tpu_custom_call.1} parent=1 // pred_check
      _
    $region35: #{tpu_custom_call.1} parent=1 // pred_check_branch
      %383 = sbr.rel (0) target = $region37
    $region36: #{tpu_custom_call.1} parent=1 // pred_region
      %s385 = ssub.s32 192, 192
      %386 = vsyncadd [#allocation4], %s385
      %s388 = sshll.u32 [#allocation8], 4
      %s389 = int_to_ptr.vmem [resolvable:$true] %s388
      %391 = dma.vmem_to_hbm [thread:$0]  %s389, 192, %s5, [#allocation4]
    $region37: #{tpu_custom_call.1} parent=1 // pred_fallthru
      _
    // Predicated region
    $region38: #{tpu_custom_call.1} parent=1 // pred_check
      _
    $region39: #{tpu_custom_call.1} parent=1 // pred_check_branch
      %393 = sbr.rel (0) target = $region41
    $region40: #{tpu_custom_call.1} parent=1 // pred_region
      %394 = dma.done [#allocation4], 192
    $region41: #{tpu_custom_call.1} parent=1 // pred_fallthru
      _
    %395 = vsyncpa [#allocation3], 1
    %396 = vsyncpa [#allocation6], 1
    %397 = vsyncpa [#allocation4], 1

</llo_original>
